<compile_context>
chip_gen: v5e
topology: v5e:2x2
jax: 0.10.0
libtpu: 0.0.40
codegen_flags: <defaults>
</compile_context>

<pallas_src>
import math

import jax
import jax.numpy as jnp
from jax.experimental import pallas as pl
from jax.experimental.pallas import tpu as pltpu


# --------------------------------------------------------------------------- #
# Table construction (mirrors PositionalEncoding.__init__)                     #
# --------------------------------------------------------------------------- #
def make_positional_encoding(d_model: int, max_len: int = 5000,
                             dtype=jnp.float32) -> jnp.ndarray:
    """Builds pe with shape (max_len, 1, d_model), matching the PyTorch buffer."""
    assert d_model % 2 == 0, "d_model must be even (same constraint as PyTorch)"
    position = jnp.arange(0, max_len, dtype=jnp.float32)[:, None]           # (max_len, 1)
    div_term = jnp.exp(
        jnp.arange(0, d_model, 2, dtype=jnp.float32) * (-math.log(10000.0) / d_model)
    )                                                                        # (d_model//2,)
    angles = position * div_term                                             # (max_len, d//2)
    pe = jnp.zeros((max_len, d_model), dtype=jnp.float32)
    pe = pe.at[:, 0::2].set(jnp.sin(angles))
    pe = pe.at[:, 1::2].set(jnp.cos(angles))
    # unsqueeze(0).transpose(0, 1) -> (max_len, 1, d_model); pre-cast once so the
    # forward never needs a per-call convert.
    return pe[:, None, :].astype(dtype)


# --------------------------------------------------------------------------- #
# Kernel                                                                        #
# --------------------------------------------------------------------------- #
def _pe_add_kernel(x_ref, pe_ref, o_ref):
    # 3-D path:  x (tS, B, D) + pe (tS, 1, D)  -> broadcast over batch (sublanes)
    # 2-D path:  x (tS, D)    + pe (tS, D)     -> dense add
    # One same-dtype VPU add; no extra casts/reshapes in the body.
    o_ref[...] = x_ref[...] + pe_ref[...]


# --------------------------------------------------------------------------- #
# Tiling helpers                                                                #
# --------------------------------------------------------------------------- #
_VMEM_LIMIT_CAP = 96 * 1024 * 1024   # never ask for more than this (128-MiB parts)
_TARGET_MIN_STEPS = 4                # >=4 pipeline steps when data allows


def _round_up(n: int, m: int) -> int:
    return ((n + m - 1) // m) * m


def _vmem_budget_and_limit():
    """Generation-aware VMEM sizing.

    v5e/v6e (128 MiB physical): limit ~96 MiB; v7x (64 MiB per TC): limit ~48 MiB.
    The pipeline budget is half the limit, leaving headroom for Mosaic scratch.
    """
    cap = 64 * 1024 * 1024            # conservative default (v7x physical per TC)
    try:
        info = pltpu.get_tpu_info()
        cap = int(getattr(info, "vmem_capacity_bytes", cap) or cap)
    except Exception:
        pass
    limit = min((cap * 3) // 4, _VMEM_LIMIT_CAP)
    return limit // 2, limit


def _choose_tile_rows(n_rows: int, per_row_bytes: int, budget: int) -> int:
    """Largest sequence-tile that (a) fits the double-buffered VMEM budget using
    the PADDED per-row footprint, (b) keeps >=4 grid steps when possible, and
    (c) stays sublane-aligned when tiling (full-extent tiles are always legal)."""
    t = max(1, budget // max(per_row_bytes, 1))
    if t >= 8:
        t = (t // 8) * 8
    # Cap so the grid has >= _TARGET_MIN_STEPS steps (DMA overlap; v7x dual-TC
    # sharding), but never shrink a step below ~256 rows of traffic.
    target = max(256, _round_up(pl.cdiv(n_rows, _TARGET_MIN_STEPS), 8))
    t = min(t, target)
    return int(min(t, n_rows))


# --------------------------------------------------------------------------- #
# Forward                                                                       #
# --------------------------------------------------------------------------- #
def positional_encoding_forward(x: jnp.ndarray, pe: jnp.ndarray,
                                *, donate_x: bool = False) -> jnp.ndarray:
    """Computes x + pe[:x.shape[0]] with x of shape (S, B, D).

    Set donate_x=True ONLY if the caller actually donates x (e.g. jit
    donate_argnums); otherwise XLA would insert a defensive full copy of x.
    """
    S, B, D = x.shape
    max_len = pe.shape[0]
    assert pe.shape == (max_len, 1, D), "pe must be (max_len, 1, d_model)"
    assert S <= max_len, "sequence length exceeds max_len of the pe table"
    if pe.dtype != x.dtype:
        # Costs one table copy; avoid by pre-casting in make_positional_encoding.
        pe = pe.astype(x.dtype)

    itemsize = jnp.dtype(x.dtype).itemsize
    sublane = {4: 8, 2: 16, 1: 32}.get(itemsize, 8)   # sublane packing per dtype
    lane_d = _round_up(D, 128)                         # lane padding of d_model
    budget, vmem_limit = _vmem_budget_and_limit()

    # Dense 2-D path (no sublane padding) when the batch dim is trivial; the
    # reshape (S, 1, D) -> (S, D) is a free row-major view.
    flatten = (B == 1)

    def per_row_bytes(flat: bool) -> int:
        if flat:
            # x-in (2 bufs) + out (2 bufs) + pe (2 bufs), one padded lane row each.
            return itemsize * lane_d * 6
        pad_b = _round_up(B, sublane)                  # batch padded on sublanes
        # x-in/out double buffered (4 padded rows) + pe (2 rows padded 1->sublane).
        return itemsize * (4 * pad_b * lane_d + 2 * sublane * lane_d)

    tS = _choose_tile_rows(S, per_row_bytes(flatten), budget)

    if flatten and (tS % 8 != 0) and not (tS == S == max_len):
        # 2-D blocks put tS on the sublane axis: it must be a multiple of 8 or
        # equal the full row extent of BOTH x (S) and pe (max_len).  Rare case
        # (tiny / odd S); fall back to the unconstrained 3-D layout.
        flatten = False
        tS = _choose_tile_rows(S, per_row_bytes(False), budget)

    grid = (pl.cdiv(S, tS),)

    if flatten:
        x_in = x.reshape(S, D)                # free view
        pe_in = pe.reshape(max_len, D)        # free squeeze of the unit batch dim
        x_spec = pl.BlockSpec((tS, D), lambda i: (i, 0))
        pe_spec = pl.BlockSpec((tS, D), lambda i: (i, 0))
        out_spec = pl.BlockSpec((tS, D), lambda i: (i, 0))
        out_shape = jax.ShapeDtypeStruct((S, D), x.dtype)
    else:
        x_in, pe_in = x, pe
        # Last two block dims equal the full array dims -> layout constraints are
        # trivially satisfied and the HBM DMAs are fully contiguous slabs.
        x_spec = pl.BlockSpec((tS, B, D), lambda i: (i, 0, 0))
        pe_spec = pl.BlockSpec((tS, 1, D), lambda i: (i, 0, 0))
        out_spec = pl.BlockSpec((tS, B, D), lambda i: (i, 0, 0))
        out_shape = jax.ShapeDtypeStruct((S, B, D), x.dtype)

    cost = pl.CostEstimate(
        flops=S * B * D,
        transcendentals=0,
        bytes_accessed=(2 * S * B * D + S * D) * itemsize,
    )

    extra_kwargs = {}
    if donate_x:
        extra_kwargs["input_output_aliases"] = {0: 0}

    out = pl.pallas_call(
        _pe_add_kernel,
        out_shape=out_shape,
        grid_spec=pl.GridSpec(
            grid=grid,
            in_specs=[x_spec, pe_spec],
            out_specs=out_spec,
        ),
        compiler_params=pltpu.CompilerParams(
            # "parallel" lets v7x shard sequence tiles across its 2 TensorCores;
            # harmless on single-TC v5e/v6e.
            dimension_semantics=("parallel",),
            vmem_limit_bytes=int(vmem_limit),
        ),
        cost_estimate=cost,
        **extra_kwargs,
    )(x_in, pe_in)

    return out.reshape(S, B, D) if flatten else out


# --------------------------------------------------------------------------- #
# Demo / self-check                                                             #
# --------------------------------------------------------------------------- #
if __name__ == "__main__":
    d_model = 32
    max_len = 64          # small max_len; semantics identical to max_len=5000
    seq_len = 8
    batch = 2

    key = jax.random.PRNGKey(0)
    x = jax.random.normal(key, (seq_len, batch, d_model), dtype=jnp.float32)
    pe = make_positional_encoding(d_model, max_len, dtype=x.dtype)

    ref = x + pe[:seq_len]
    out = jax.block_until_ready(positional_encoding_forward(x, pe))
    assert out.shape == (seq_len, batch, d_model)
    assert jnp.allclose(out, ref, atol=1e-6), "mismatch vs reference (3-D path)"

    # Also exercise the dense 2-D (batch == 1) path.
    x1 = jax.random.normal(jax.random.PRNGKey(1), (seq_len, 1, d_model),
                           dtype=jnp.float32)
    out1 = jax.block_until_ready(positional_encoding_forward(x1, pe))
    assert jnp.allclose(out1, x1 + pe[:seq_len], atol=1e-6), \
        "mismatch vs reference (2-D path)"

    print("KERNEL_OK")
</pallas_src>

<mosaic_0001>
module attributes {stable_mosaic.version = 11 : i64} {
  func.func @_pe_add_kernel(%arg0: i32, %arg1: memref<8x2x32xf32, #tpu.memory_space<vmem>>, %arg2: memref<8x1x32xf32, #tpu.memory_space<vmem>>, %arg3: memref<8x2x32xf32, #tpu.memory_space<vmem>>) attributes {dimension_semantics = [#tpu.dimension_semantics<parallel>], iteration_bounds = array<i64: 1>, scalar_prefetch = 0 : i64, scratch_operands = 0 : i64, tpu.core_type = #tpu.core_type<tc>, window_params = [{transform_indices = @transform_0, window_bounds = array<i64: 8, 2, 32>}, {transform_indices = @transform_1, window_bounds = array<i64: 8, 1, 32>}, {transform_indices = @transform_2, window_bounds = array<i64: 8, 2, 32>}]} {
    %c0 = arith.constant 0 : index
    %c0_0 = arith.constant 0 : index
    %c0_1 = arith.constant 0 : index
    %0 = vector.load %arg1[%c0, %c0_0, %c0_1] : memref<8x2x32xf32, #tpu.memory_space<vmem>>, vector<8x2x32xf32>
    %c0_2 = arith.constant 0 : index
    %c0_3 = arith.constant 0 : index
    %c0_4 = arith.constant 0 : index
    %1 = vector.load %arg2[%c0_2, %c0_3, %c0_4] : memref<8x1x32xf32, #tpu.memory_space<vmem>>, vector<8x1x32xf32>
    %2 = vector.broadcast %1 : vector<8x1x32xf32> to vector<8x2x32xf32>
    %3 = arith.addf %0, %2 : vector<8x2x32xf32>
    %c0_5 = arith.constant 0 : index
    %c0_6 = arith.constant 0 : index
    %c0_7 = arith.constant 0 : index
    %4 = vector.load %arg3[%c0_5, %c0_6, %c0_7] : memref<8x2x32xf32, #tpu.memory_space<vmem>>, vector<8x2x32xf32>
    tpu.vector_store %arg3[%c0_5, %c0_6, %c0_7], %3 {strides = array<i32>} : memref<8x2x32xf32, #tpu.memory_space<vmem>>, vector<8x2x32xf32>,
    return
  }
  func.func @transform_0(%arg0: i32) -> (i32, i32, i32) {
    %c0_i32 = arith.constant 0 : i32
    %c0_i32_0 = arith.constant 0 : i32
    %c0_i32_1 = arith.constant 0 : i32
    return %arg0, %c0_i32, %c0_i32_0 : i32, i32, i32
  }
  func.func @transform_1(%arg0: i32) -> (i32, i32, i32) {
    %c0_i32 = arith.constant 0 : i32
    %c0_i32_0 = arith.constant 0 : i32
    %c0_i32_1 = arith.constant 0 : i32
    return %arg0, %c0_i32, %c0_i32_0 : i32, i32, i32
  }
  func.func @transform_2(%arg0: i32) -> (i32, i32, i32) {
    %c0_i32 = arith.constant 0 : i32
    %c0_i32_0 = arith.constant 0 : i32
    %c0_i32_1 = arith.constant 0 : i32
    return %arg0, %c0_i32, %c0_i32_0 : i32, i32, i32
  }
}

</mosaic_0001>

<llo_original>
// kernel: tpu_custom_call.1
$region0: #{tpu_custom_call.1}
  #allocation0 [shape = 'u32[]', space=smem, size = 0x4, offset = 0x4, fixed_abs, tag = 'smem constant byte address 0x4 - core index']
  #allocation1 [shape = 'u32[72,128]{1,0:T(1,128)}', space=vmem, size = 0x9000, scoped, tag = 'internal scratch']
  %s0 = inlined_call_operand.vmem [shape: f32[8,2,32], index: 0, kind: input, shape index: {}]
  %s1 = inlined_call_operand.vmem [shape: f32[64,1,32], index: 1, kind: input, shape index: {}]
  %s2 = inlined_call_operand.hbm [shape: f32[8,2,32], index: 2, kind: output, shape index: {}]
  %s3 = sld [smem:[#allocation0]]
  $region18: #{tpu_custom_call.1} parent=0
    _
  %s5 = ssub.s32 1, %s3
  %s6 = scalar_select 0, %s5, %s3
  $region1: #{tpu_custom_call.1} parent=0
    #allocation2 [shape = 'u8[8192]{0}', space=vmem, size = 0x2000, scoped, tag = 'output window, operand 0, single buffered']
    #allocation3 [shape = 's32[1]{0}', space=sflag, size = 0x4, scoped, tag = 'scoped memory for tpu_custom_call.1']
    %7 = vsyncpa [#allocation3], 0
    // Predicated region
    $region2: #{tpu_custom_call.1} parent=1 // pred_check
      _
    $region3: #{tpu_custom_call.1} parent=1 // pred_check_branch
      %9 = sbr.rel (0) target = $region5
    $region4: #{tpu_custom_call.1} parent=1 // pred_region
      _
    $region5: #{tpu_custom_call.1} parent=1 // pred_fallthru
      _
    // Predicated region
    $region6: #{tpu_custom_call.1} parent=1 // pred_check
      _
    $region7: #{tpu_custom_call.1} parent=1 // pred_check_branch
      %11 = sbr.rel (0) target = $region9
    $region8: #{tpu_custom_call.1} parent=1 // pred_region
      _
    $region9: #{tpu_custom_call.1} parent=1 // pred_fallthru
      _
    %v12 = vld [vmem:[%s0] sm:$0x3]
    %v13 = vld [vmem:[%s0 + $0x2] sm:$0x3]
    %v14 = vld [vmem:[%s0 + $0x4] sm:$0x3]
    %v15 = vld [vmem:[%s0 + $0x6] sm:$0x3]
    %v16 = vld [vmem:[%s0 + $0x8] sm:$0x3]
    %v17 = vld [vmem:[%s0 + $0xa] sm:$0x3]
    %v18 = vld [vmem:[%s0 + $0xc] sm:$0x3]
    %v19 = vld [vmem:[%s0 + $0xe] sm:$0x3]
    %v20 = vld [vmem:[%s1] sm:$0x1]
    %v21 = vld [vmem:[%s1 + $0x1] sm:$0x1]
    %v22 = vld [vmem:[%s1 + $0x2] sm:$0x1]
    %v23 = vld [vmem:[%s1 + $0x3] sm:$0x1]
    %v24 = vld [vmem:[%s1 + $0x4] sm:$0x1]
    %v25 = vld [vmem:[%s1 + $0x5] sm:$0x1]
    %v26 = vld [vmem:[%s1 + $0x6] sm:$0x1]
    %v27 = vld [vmem:[%s1 + $0x7] sm:$0x1]
    %v36 = vperm.slane %v20, 0
    %v37 = vperm.slane %v21, 0
    %v38 = vperm.slane %v22, 0
    %v39 = vperm.slane %v23, 0
    %v40 = vperm.slane %v24, 0
    %v41 = vperm.slane %v25, 0
    %v42 = vperm.slane %v26, 0
    %v43 = vperm.slane %v27, 0
    %v52 = vadd.f32 %v12, %v36
    %v53 = vadd.f32 %v13, %v37
    %v54 = vadd.f32 %v14, %v38
    %v55 = vadd.f32 %v15, %v39
    %v56 = vadd.f32 %v16, %v40
    %v57 = vadd.f32 %v17, %v41
    %v58 = vadd.f32 %v18, %v42
    %v59 = vadd.f32 %v19, %v43
    %vm60 = vcmask 254976
    %61 = vst.msk [vmem:[#allocation2] sm:$0x3] %vm60, %v52
    %62 = vst.msk [vmem:[#allocation2 + $0x2] sm:$0x3] %vm60, %v53
    %63 = vst.msk [vmem:[#allocation2 + $0x4] sm:$0x3] %vm60, %v54
    %64 = vst.msk [vmem:[#allocation2 + $0x6] sm:$0x3] %vm60, %v55
    %65 = vst.msk [vmem:[#allocation2 + $0x8] sm:$0x3] %vm60, %v56
    %66 = vst.msk [vmem:[#allocation2 + $0xa] sm:$0x3] %vm60, %v57
    %67 = vst.msk [vmem:[#allocation2 + $0xc] sm:$0x3] %vm60, %v58
    %68 = vst.msk [vmem:[#allocation2 + $0xe] sm:$0x3] %vm60, %v59
    // Predicated region
    $region10: #{tpu_custom_call.1} parent=1 // pred_check
      _
    $region11: #{tpu_custom_call.1} parent=1 // pred_check_branch
      %70 = sbr.rel (0) target = $region13
    $region12: #{tpu_custom_call.1} parent=1 // pred_region
      %72 = vsyncadd [#allocation3], 0
      %s73 = sshll.u32 [#allocation2], 4
      %s74 = int_to_ptr.vmem [resolvable:$true] %s73
      %s75 = sshll.u32 %s2, 4
      %s76 = int_to_ptr.hbm [resolvable:$true] %s75
      %81 = dma.vmem_to_hbm [thread:$0]  %s74, 256, %s76, [#allocation3], 32, 32, 2
    $region13: #{tpu_custom_call.1} parent=1 // pred_fallthru
      _
    // Predicated region
    $region14: #{tpu_custom_call.1} parent=1 // pred_check
      _
    $region15: #{tpu_custom_call.1} parent=1 // pred_check_branch
      %83 = sbr.rel (0) target = $region17
    $region16: #{tpu_custom_call.1} parent=1 // pred_region
      %85 = dma.done [#allocation3], 256
    $region17: #{tpu_custom_call.1} parent=1 // pred_fallthru
      _
    %86 = vsyncpa [#allocation3], 1

</llo_original>
